<compile_context>
chip_gen: v7x
topology: tpu7x:2x2x1
jax: 0.10.0
libtpu: 0.0.40
codegen_flags: <defaults>
</compile_context>

<pallas_src>
import jax
import jax.numpy as jnp
from jax.experimental import pallas as pl
from jax.experimental.pallas import tpu as pltpu

TP_MAX = 4096   # pixels (lanes) per grid step; multiple of 128


def _make_kernel(hp, use_weight):
    """hp = true number of pixels per batch element (for in-kernel tail masking)."""

    def kernel(logits_ref, target_ref, weight_ref, loss_ref, cnt_ref,
               acc_loss, acc_cnt):
        pi = pl.program_id(1)

        @pl.when(pi == 0)
        def _():
            acc_loss[...] = jnp.zeros_like(acc_loss)
            acc_cnt[...] = jnp.zeros_like(acc_cnt)

        x = logits_ref[0].astype(jnp.float32)       # (C, TP)  pixels on lanes
        t = target_ref[0]                           # (1, TP)  int32 labels
        c, tp = x.shape

        # log-softmax over the class (sublane) axis.  Only the target row is needed,
        # so gather z at the target class and subtract lse from the (1, TP) result
        # instead of materialising the full (C, TP) log-probabilities.
        m = jnp.max(x, axis=0, keepdims=True)                        # (1, TP)
        z = x - m                                                    # (C, TP)
        lse = jnp.log(jnp.sum(jnp.exp(z), axis=0, keepdims=True))    # (1, TP)

        c_ids = jax.lax.broadcasted_iota(jnp.int32, (c, tp), 0)      # class id per row
        onehot = c_ids == t                                          # (C, TP)
        picked_z = jnp.sum(jnp.where(onehot, z, 0.0), axis=0, keepdims=True)
        nll = lse - picked_z                                         # (1, TP) = -log p[target]

        if use_weight:
            w = weight_ref[...].astype(jnp.float32)                  # (C, 1)
            pw = jnp.sum(jnp.where(onehot, w, 0.0), axis=0, keepdims=True)
            nll = nll * pw

        # valid pixels: target >= 0, target != 255 (ignore) and inside the true pixel range
        valid = jnp.logical_and(t >= 0, t != 255)
        lane = jax.lax.broadcasted_iota(jnp.int32, (1, tp), 1)
        valid = jnp.logical_and(valid, pi * tp + lane < hp)

        acc_loss[...] += jnp.where(valid, nll, 0.0)
        acc_cnt[...] += valid.astype(jnp.float32)

        @pl.when(pi == pl.num_programs(1) - 1)
        def _():
            loss_ref[...] = jnp.sum(acc_loss[...]).reshape(1, 1, 1)
            cnt_ref[...] = jnp.sum(acc_cnt[...]).reshape(1, 1, 1)

    return kernel


def supervised_loss(input_nchw, target_nhw, weight=None, *,
                    size_average=True, pad=50):
    """JAX/Pallas equivalent of Supervised_loss.forward.

    input_nchw : (N, C, H, W) float logits
    target_nhw : (N, H, W) integer labels; <0 or ==255 are ignored
    weight     : optional (C,) class weights (None -> unweighted)
    returns    : (1,) float32 loss
    """
    n, c, h, w = input_nchw.shape
    x = input_nchw[:, :, pad:h - pad, pad:w - pad]
    t = target_nhw[:, pad:h - pad, pad:w - pad]
    _, _, hh, ww = x.shape
    hp = hh * ww

    # channels-major / pixels-on-lanes view: a pure (contiguous) reshape of the NCHW crop.
    logits = x.reshape(n, c, hp)
    tflat = t.reshape(n, 1, hp).astype(jnp.int32)

    use_weight = weight is not None
    wcol = (jnp.asarray(weight, jnp.float32) if use_weight
            else jnp.ones((c,), jnp.float32)).reshape(c, 1)

    # block = full pixel dim if it fits, else TP_MAX (multiple of 128); ragged tail is
    # masked in-kernel, no jnp.pad copy of the logits.
    tp = hp if hp <= TP_MAX else TP_MAX
    n_ptiles = pl.cdiv(hp, tp)

    kernel = _make_kernel(hp, use_weight)

    loss_parts, cnt_parts = pl.pallas_call(
        kernel,
        out_shape=(jax.ShapeDtypeStruct((n, 1, 1), jnp.float32),
                   jax.ShapeDtypeStruct((n, 1, 1), jnp.float32)),
        grid_spec=pltpu.PrefetchScalarGridSpec(
            num_scalar_prefetch=0,
            grid=(n, n_ptiles),
            in_specs=[pl.BlockSpec((1, c, tp), lambda ni, pi: (ni, 0, pi)),
                      pl.BlockSpec((1, 1, tp), lambda ni, pi: (ni, 0, pi)),
                      pl.BlockSpec((c, 1), lambda ni, pi: (0, 0))],
            out_specs=(pl.BlockSpec((1, 1, 1), lambda ni, pi: (ni, 0, 0)),
                       pl.BlockSpec((1, 1, 1), lambda ni, pi: (ni, 0, 0))),
            scratch_shapes=[pltpu.VMEM((1, tp), jnp.float32),
                            pltpu.VMEM((1, tp), jnp.float32)]),
        compiler_params=pltpu.CompilerParams(
            dimension_semantics=("parallel", "arbitrary")),
    )(logits, tflat, wcol)

    loss = jnp.sum(loss_parts)
    if size_average:
        # NOTE: matches the torch module exactly: it divides by mask.sum() (valid-pixel
        # count), not by the sum of per-pixel class weights.
        loss = loss / jnp.sum(cnt_parts)
    return loss.reshape(1)


def _reference_loss(input_nchw, target_nhw, weight=None, *,
                    size_average=True, pad=50):
    n, c, h, w = input_nchw.shape
    x = input_nchw[:, :, pad:h - pad, pad:w - pad].astype(jnp.float32)
    t = target_nhw[:, pad:h - pad, pad:w - pad].astype(jnp.int32)
    logp = jax.nn.log_softmax(x, axis=1)                        # (n,c,hh,ww)
    valid = jnp.logical_and(t >= 0, t != 255)
    tc = jnp.clip(t, 0, c - 1)
    picked = jnp.take_along_axis(logp, tc[:, None], axis=1)[:, 0]
    wvec = jnp.ones((c,), jnp.float32) if weight is None else jnp.asarray(weight, jnp.float32)
    picked = picked * wvec[tc]
    loss = jnp.sum(jnp.where(valid, -picked, 0.0))
    if size_average:
        loss = loss / jnp.sum(valid).astype(jnp.float32)
    return loss.reshape(1)


if __name__ == "__main__":
    key = jax.random.PRNGKey(0)
    k1, k2, k3, k4 = jax.random.split(key, 4)

    # Small shapes consistent with the module: pad=4 crop of a 24x24 map -> 16x16.
    N, C, H, W = 2, 4, 24, 24
    PAD = 4
    SIZE_AVERAGE = True

    x = jax.random.normal(k1, (N, C, H, W), dtype=jnp.float32)
    target = jax.random.randint(k2, (N, H, W), 0, C).astype(jnp.int32)
    # sprinkle ignore labels (255) and negative labels (<0) to exercise masking
    ignore_mask = jax.random.uniform(k3, (N, H, W)) < 0.1
    neg_mask = jax.random.uniform(k4, (N, H, W)) < 0.05
    target = jnp.where(ignore_mask, 255, target)
    target = jnp.where(neg_mask, -1, target)

    # unweighted path
    out = jax.block_until_ready(
        supervised_loss(x, target, None, size_average=SIZE_AVERAGE, pad=PAD))
    ref = jax.block_until_ready(
        _reference_loss(x, target, None, size_average=SIZE_AVERAGE, pad=PAD))
    assert out.shape == (1,), out.shape
    assert jnp.allclose(out, ref, rtol=1e-5, atol=1e-4), (out, ref)

    # weighted path (exercises the per-class weight gather)
    wts = jnp.array([0.5, 2.0, 1.0, 1.5], jnp.float32)
    out_w = jax.block_until_ready(
        supervised_loss(x, target, wts, size_average=SIZE_AVERAGE, pad=PAD))
    ref_w = jax.block_until_ready(
        _reference_loss(x, target, wts, size_average=SIZE_AVERAGE, pad=PAD))
    assert jnp.allclose(out_w, ref_w, rtol=1e-5, atol=1e-4), (out_w, ref_w)

    print("KERNEL_OK")
</pallas_src>

<mosaic_0001>
module attributes {stable_mosaic.version = 11 : i64} {
  func.func @kernel(%arg0: i32, %arg1: i32, %arg2: memref<1x4x256xf32, #tpu.memory_space<vmem>>, %arg3: memref<1x1x256xi32, #tpu.memory_space<vmem>>, %arg4: memref<4x1xf32, #tpu.memory_space<vmem>>, %arg5: memref<1x1x1xf32, #tpu.memory_space<vmem>>, %arg6: memref<1x1x1xf32, #tpu.memory_space<vmem>>, %arg7: memref<1x256xf32, #tpu.memory_space<vmem>>, %arg8: memref<1x256xf32, #tpu.memory_space<vmem>>) attributes {dimension_semantics = [#tpu.dimension_semantics<parallel>, #tpu.dimension_semantics<arbitrary>], iteration_bounds = array<i64: 2, 1>, scalar_prefetch = 0 : i64, scratch_operands = 2 : i64, tpu.core_type = #tpu.core_type<tc>, window_params = [{transform_indices = @transform_0, window_bounds = array<i64: 1, 4, 256>}, {transform_indices = @transform_1, window_bounds = array<i64: 1, 1, 256>}, {pipeline_mode = #tpu.pipeline_mode<synchronous>, transform_indices = @transform_2, window_bounds = array<i64: 4, 1>}, {transform_indices = @transform_3, window_bounds = array<i64: 1, 1, 1>}, {transform_indices = @transform_4, window_bounds = array<i64: 1, 1, 1>}]} {
    %c0_i32 = arith.constant 0 : i32
    %0 = arith.cmpi eq, %arg1, %c0_i32 : i32
    %1 = arith.extui %0 : i1 to i32
    %c0_i32_0 = arith.constant 0 : i32
    %2 = arith.cmpi ne, %1, %c0_i32_0 : i32
    scf.if %2 {
      %cst_22 = arith.constant 0.000000e+00 : f32
      %48 = vector.broadcast %cst_22 : f32 to vector<1x256xf32>
      %c0_23 = arith.constant 0 : index
      %c0_24 = arith.constant 0 : index
      %49 = vector.load %arg7[%c0_23, %c0_24] : memref<1x256xf32, #tpu.memory_space<vmem>>, vector<1x256xf32>
      tpu.vector_store %arg7[%c0_23, %c0_24], %48 {strides = array<i32>} : memref<1x256xf32, #tpu.memory_space<vmem>>, vector<1x256xf32>,
      %cst_25 = arith.constant 0.000000e+00 : f32
      %50 = vector.broadcast %cst_25 : f32 to vector<1x256xf32>
      %c0_26 = arith.constant 0 : index
      %c0_27 = arith.constant 0 : index
      %51 = vector.load %arg8[%c0_26, %c0_27] : memref<1x256xf32, #tpu.memory_space<vmem>>, vector<1x256xf32>
      tpu.vector_store %arg8[%c0_26, %c0_27], %50 {strides = array<i32>} : memref<1x256xf32, #tpu.memory_space<vmem>>, vector<1x256xf32>,
    } else {
    }
    %c0 = arith.constant 0 : index
    %c0_1 = arith.constant 0 : index
    %c0_2 = arith.constant 0 : index
    %3 = vector.load %arg2[%c0, %c0_1, %c0_2] : memref<1x4x256xf32, #tpu.memory_space<vmem>>, vector<1x4x256xf32>
    %4 = vector.shape_cast %3 : vector<1x4x256xf32> to vector<4x256xf32>
    %c0_3 = arith.constant 0 : index
    %c0_4 = arith.constant 0 : index
    %c0_5 = arith.constant 0 : index
    %5 = vector.load %arg3[%c0_3, %c0_4, %c0_5] : memref<1x1x256xi32, #tpu.memory_space<vmem>>, vector<1x1x256xi32>
    %6 = vector.shape_cast %5 : vector<1x1x256xi32> to vector<1x256xi32>
    %cst = arith.constant dense<0xFF800000> : vector<256xf32>
    %7 = vector.multi_reduction <maximumf>, %4, %cst [0] : vector<4x256xf32> to vector<256xf32>
    %8 = vector.shape_cast %7 : vector<256xf32> to vector<1x256xf32>
    %9 = vector.broadcast %8 : vector<1x256xf32> to vector<4x256xf32>
    %10 = arith.subf %4, %9 : vector<4x256xf32>
    %11 = math.exp %10 : vector<4x256xf32>
    %cst_6 = arith.constant dense<0.000000e+00> : vector<256xf32>
    %12 = vector.multi_reduction <add>, %11, %cst_6 [0] : vector<4x256xf32> to vector<256xf32>
    %13 = vector.shape_cast %12 : vector<256xf32> to vector<1x256xf32>
    %14 = math.log %13 : vector<1x256xf32>
    %15 = tpu.iota {dimensions = array<i32: 0>} : vector<4x256xi32>
    %16 = vector.broadcast %6 : vector<1x256xi32> to vector<4x256xi32>
    %17 = arith.cmpi eq, %15, %16 : vector<4x256xi32>
    %cst_7 = arith.constant 0.000000e+00 : f32
    %18 = vector.broadcast %cst_7 : f32 to vector<4x256xf32>
    %19 = arith.select %17, %10, %18 : vector<4x256xi1>, vector<4x256xf32>
    %cst_8 = arith.constant dense<0.000000e+00> : vector<256xf32>
    %20 = vector.multi_reduction <add>, %19, %cst_8 [0] : vector<4x256xf32> to vector<256xf32>
    %21 = vector.shape_cast %20 : vector<256xf32> to vector<1x256xf32>
    %22 = arith.subf %14, %21 : vector<1x256xf32>
    %c0_i32_9 = arith.constant 0 : i32
    %23 = vector.broadcast %c0_i32_9 : i32 to vector<1x256xi32>
    %24 = arith.cmpi sge, %6, %23 : vector<1x256xi32>
    %c255_i32 = arith.constant 255 : i32
    %25 = vector.broadcast %c255_i32 : i32 to vector<1x256xi32>
    %26 = arith.cmpi ne, %6, %25 : vector<1x256xi32>
    %27 = arith.andi %24, %26 : vector<1x256xi1>
    %28 = tpu.iota {dimensions = array<i32: 1>} : vector<1x256xi32>
    %c256_i32 = arith.constant 256 : i32
    %29 = arith.muli %arg1, %c256_i32 : i32
    %30 = vector.broadcast %29 : i32 to vector<1x256xi32>
    %31 = arith.addi %30, %28 : vector<1x256xi32>
    %c256_i32_10 = arith.constant 256 : i32
    %32 = vector.broadcast %c256_i32_10 : i32 to vector<1x256xi32>
    %33 = arith.cmpi slt, %31, %32 : vector<1x256xi32>
    %34 = arith.andi %27, %33 : vector<1x256xi1>
    %c0_11 = arith.constant 0 : index
    %c0_12 = arith.constant 0 : index
    %35 = vector.load %arg7[%c0_11, %c0_12] : memref<1x256xf32, #tpu.memory_space<vmem>>, vector<1x256xf32>
    %cst_13 = arith.constant 0.000000e+00 : f32
    %36 = vector.broadcast %cst_13 : f32 to vector<1x256xf32>
    %37 = arith.select %34, %22, %36 : vector<1x256xi1>, vector<1x256xf32>
    %38 = arith.addf %35, %37 : vector<1x256xf32>
    %c0_14 = arith.constant 0 : index
    %c0_15 = arith.constant 0 : index
    %39 = vector.load %arg7[%c0_14, %c0_15] : memref<1x256xf32, #tpu.memory_space<vmem>>, vector<1x256xf32>
    tpu.vector_store %arg7[%c0_14, %c0_15], %38 {strides = array<i32>} : memref<1x256xf32, #tpu.memory_space<vmem>>, vector<1x256xf32>,
    %c0_16 = arith.constant 0 : index
    %c0_17 = arith.constant 0 : index
    %40 = vector.load %arg8[%c0_16, %c0_17] : memref<1x256xf32, #tpu.memory_space<vmem>>, vector<1x256xf32>
    %41 = arith.extui %34 : vector<1x256xi1> to vector<1x256xi32>
    %42 = arith.sitofp %41 : vector<1x256xi32> to vector<1x256xf32>
    %43 = arith.addf %40, %42 : vector<1x256xf32>
    %c0_18 = arith.constant 0 : index
    %c0_19 = arith.constant 0 : index
    %44 = vector.load %arg8[%c0_18, %c0_19] : memref<1x256xf32, #tpu.memory_space<vmem>>, vector<1x256xf32>
    tpu.vector_store %arg8[%c0_18, %c0_19], %43 {strides = array<i32>} : memref<1x256xf32, #tpu.memory_space<vmem>>, vector<1x256xf32>,
    %c0_i32_20 = arith.constant 0 : i32
    %45 = arith.cmpi eq, %arg1, %c0_i32_20 : i32
    %46 = arith.extui %45 : i1 to i32
    %c0_i32_21 = arith.constant 0 : i32
    %47 = arith.cmpi ne, %46, %c0_i32_21 : i32
    scf.if %47 {
      %c0_22 = arith.constant 0 : index
      %c0_23 = arith.constant 0 : index
      %48 = vector.load %arg7[%c0_22, %c0_23] : memref<1x256xf32, #tpu.memory_space<vmem>>, vector<1x256xf32>
      %49 = vector.shape_cast %48 : vector<1x256xf32> to vector<1x1x256xf32>
      %cst_24 = arith.constant dense<0.000000e+00> : vector<1xf32>
      %50 = vector.multi_reduction <add>, %49, %cst_24 [1, 2] : vector<1x1x256xf32> to vector<1xf32>
      %51 = vector.shape_cast %50 : vector<1xf32> to vector<1x1x1xf32>
      %52 = vector.extract %51[0, 0, 0] : f32 from vector<1x1x1xf32>
      %53 = vector.broadcast %52 : f32 to vector<1x1x1xf32>
      %c0_25 = arith.constant 0 : index
      %c0_26 = arith.constant 0 : index
      %c0_27 = arith.constant 0 : index
      %54 = vector.load %arg5[%c0_25, %c0_26, %c0_27] : memref<1x1x1xf32, #tpu.memory_space<vmem>>, vector<1x1x1xf32>
      tpu.vector_store %arg5[%c0_25, %c0_26, %c0_27], %53 {strides = array<i32>} : memref<1x1x1xf32, #tpu.memory_space<vmem>>, vector<1x1x1xf32>,
      %c0_28 = arith.constant 0 : index
      %c0_29 = arith.constant 0 : index
      %55 = vector.load %arg8[%c0_28, %c0_29] : memref<1x256xf32, #tpu.memory_space<vmem>>, vector<1x256xf32>
      %56 = vector.shape_cast %55 : vector<1x256xf32> to vector<1x1x256xf32>
      %cst_30 = arith.constant dense<0.000000e+00> : vector<1xf32>
      %57 = vector.multi_reduction <add>, %56, %cst_30 [1, 2] : vector<1x1x256xf32> to vector<1xf32>
      %58 = vector.shape_cast %57 : vector<1xf32> to vector<1x1x1xf32>
      %59 = vector.extract %58[0, 0, 0] : f32 from vector<1x1x1xf32>
      %60 = vector.broadcast %59 : f32 to vector<1x1x1xf32>
      %c0_31 = arith.constant 0 : index
      %c0_32 = arith.constant 0 : index
      %c0_33 = arith.constant 0 : index
      %61 = vector.load %arg6[%c0_31, %c0_32, %c0_33] : memref<1x1x1xf32, #tpu.memory_space<vmem>>, vector<1x1x1xf32>
      tpu.vector_store %arg6[%c0_31, %c0_32, %c0_33], %60 {strides = array<i32>} : memref<1x1x1xf32, #tpu.memory_space<vmem>>, vector<1x1x1xf32>,
    } else {
    }
    return
  }
  func.func @transform_0(%arg0: i32, %arg1: i32) -> (i32, i32, i32) {
    %c0_i32 = arith.constant 0 : i32
    %c0_i32_0 = arith.constant 0 : i32
    return %arg0, %c0_i32, %arg1 : i32, i32, i32
  }
  func.func @transform_1(%arg0: i32, %arg1: i32) -> (i32, i32, i32) {
    %c0_i32 = arith.constant 0 : i32
    %c0_i32_0 = arith.constant 0 : i32
    return %arg0, %c0_i32, %arg1 : i32, i32, i32
  }
  func.func @transform_2(%arg0: i32, %arg1: i32) -> (i32, i32) {
    %c0_i32 = arith.constant 0 : i32
    %c0_i32_0 = arith.constant 0 : i32
    %c0_i32_1 = arith.constant 0 : i32
    return %c0_i32, %c0_i32_0 : i32, i32
  }
  func.func @transform_3(%arg0: i32, %arg1: i32) -> (i32, i32, i32) {
    %c0_i32 = arith.constant 0 : i32
    %c0_i32_0 = arith.constant 0 : i32
    %c0_i32_1 = arith.constant 0 : i32
    return %arg0, %c0_i32, %c0_i32_0 : i32, i32, i32
  }
  func.func @transform_4(%arg0: i32, %arg1: i32) -> (i32, i32, i32) {
    %c0_i32 = arith.constant 0 : i32
    %c0_i32_0 = arith.constant 0 : i32
    %c0_i32_1 = arith.constant 0 : i32
    return %arg0, %c0_i32, %c0_i32_0 : i32, i32, i32
  }
}

</mosaic_0001>

<llo_original>
// kernel: tpu_custom_call.1
$region0: #{tpu_custom_call.1}
  #allocation0 [shape = 'u32[]', space=smem, size = 0x4, offset = 0x4, fixed_abs, tag = 'smem constant byte address 0x4 - core index']
  #allocation1 [shape = 'u32[144,128]{1,0:T(1,128)}', space=vmem, size = 0x12000, scoped, tag = 'internal scratch']
  #allocation2 [shape = 'f32[1,256]{1,0:T(1,128)}', space=vmem, size = 0x400, scoped, tag = 'scratch operand']
  #allocation3 [shape = 'f32[1,256]{1,0:T(1,128)}', space=vmem, size = 0x400, scoped, tag = 'scratch operand']
  %s0 = inlined_call_operand.hbm [shape: f32[2,4,256], index: 0, kind: input, shape index: {}]
  %s1 = inlined_call_operand.vmem [shape: s32[2,1,256], index: 1, kind: input, shape index: {}]
  %s2 = inlined_call_operand.vmem [shape: f32[4,1], index: 2, kind: input, shape index: {}]
  %s3 = inlined_call_operand.vmem [shape: f32[2,1,1], index: 3, kind: output, shape index: {0}]
  %s4 = inlined_call_operand.vmem [shape: f32[2,1,1], index: 4, kind: output, shape index: {1}]
  %5 = xla_tuple %s3, %s4
  %s6 = sld [smem:[#allocation0]]
  $region65: #{tpu_custom_call.1} parent=0
    _
  %s8 = ssub.s32 1, %s6
  %s9 = scalar_select 0, %s8, %s6
  $region1: #{tpu_custom_call.1} parent=0
    #allocation4 [shape = 'u8[8192]{0}', space=vmem, size = 0x2000, scoped, tag = 'input window, operand 0']
    #allocation5 [shape = 's32[2]{0}', space=sflag, size = 0x8, scoped, tag = 'scoped memory for tpu_custom_call.1']
    %10 = vsyncpa [#allocation5], 0
    %s11 = scalar_lea.sflag [#allocation5], 1
    %12 = vsyncpa %s11, 0
    loop: start=0, step=1, limit=4
    $region2: #{tpu_custom_call.1} parent=1 // loop_pre_header
      _
    $region3: #{tpu_custom_call.1} parent=1 // loop_header
      %s14 = sphi 0, %s18
      %p15 = scmp.ge.s32.totalorder %s14, 4
      %s21 = sphi 0, %s33
      %s22 = sphi 0, %s29
      %s23 = sphi 0, %s21
      %s24 = sphi 0, %s22
      %s25 = sphi 0, %s23
      %s26 = sphi 0, %s24
      %s38 = sphi 0, %s40
      %s41 = sphi 0, %s38
      %s42 = sphi 0, %s41
      %s58 = sphi 0, %s42
      %s66 = sphi 0, %s68
      %s69 = sphi 0, %s66
      %s70 = sphi 0, %s69
      %s86 = sphi 0, %s70
      %s90 = sphi 0, %s90
      %s92 = sphi 0, %s90
      %s93 = sphi 0, %s92
      %s107 = sphi 0, %s93
      %s113 = sphi 0, %s115
      %s116 = sphi 0, %s113
      %s117 = sphi 0, %s116
      %s133 = sphi 0, %s117
      %s139 = sphi 0, %s141
      %s142 = sphi 0, %s139
      %s143 = sphi 0, %s142
      %s159 = sphi 0, %s143
    $region4: #{tpu_custom_call.1} parent=1 // loop_header_branch
      %17 = sbr.rel (%p15) target = $region8
    $region5: #{tpu_custom_call.1} parent=1 // loop_body
      %s19 = ssub.s32 %s14, 1
      %s20 = ssub.s32 %s14, 2
      %s27 = sadd.s32 1, %s22
      %p28 = scmp.ge.s32.totalorder %s27, 1
      %s29 = scalar_select %p28, 0, %s27
      %s30 = sadd.s32 1, %s21
      %s31 = scalar_select %p28, %s30, %s21
      %p32 = scmp.ge.s32.totalorder %s31, 2
      %s33 = scalar_select %p32, 0, %s31
      %s34 = ssub.s32 %s21, %s33
      %s35 = ssub.s32 %s22, %s29
      %s36 = sor.u32 %s34, %s35
      %p37 = scmp.eq.s32.totalorder %s36, 0
      %s39 = sadd.s32 %s38, 1
      %s40 = scalar_select %p37, %s38, %s39
      %p43 = pneg %p37
      %p44 = scmp.eq.s32.totalorder %s14, 1
      %p45 = por %p43, %p44
      %p46 = scmp.ne.s32.totalorder %s38, %s41
      %p47 = scmp.eq.s32.totalorder %s14, 0
      %p48 = por %p46, %p47
      %p49 = scmp.ne.s32.totalorder %s38, %s41
      %p50 = scmp.eq.s32.totalorder %s19, 1
      %p51 = por %p49, %p50
      %p52 = scmp.ne.s32.totalorder %s41, %s42
      %p53 = scmp.eq.s32.totalorder %s19, 0
      %p54 = por %p52, %p53
      %p55 = scmp.ne.s32.totalorder %s41, %s42
      %p56 = scmp.eq.s32.totalorder %s20, 1
      %p57 = por %p55, %p56
      %p59 = scmp.ne.s32.totalorder %s42, %s58
      %p60 = scmp.eq.s32.totalorder %s20, 0
      %p61 = por %p59, %p60
      %s62 = ssub.s32 %s21, %s33
      %s63 = ssub.s32 %s22, %s29
      %s64 = sor.u32 %s62, %s63
      %p65 = scmp.eq.s32.totalorder %s64, 0
      %s67 = sadd.s32 %s66, 1
      %s68 = scalar_select %p65, %s66, %s67
      %p71 = pneg %p65
      %p72 = scmp.eq.s32.totalorder %s14, 1
      %p73 = por %p71, %p72
      %p74 = scmp.ne.s32.totalorder %s66, %s69
      %p75 = scmp.eq.s32.totalorder %s14, 0
      %p76 = por %p74, %p75
      %p77 = scmp.ne.s32.totalorder %s66, %s69
      %p78 = scmp.eq.s32.totalorder %s19, 1
      %p79 = por %p77, %p78
      %p80 = scmp.ne.s32.totalorder %s69, %s70
      %p81 = scmp.eq.s32.totalorder %s19, 0
      %p82 = por %p80, %p81
      %p83 = scmp.ne.s32.totalorder %s69, %s70
      %p84 = scmp.eq.s32.totalorder %s20, 1
      %p85 = por %p83, %p84
      %p87 = scmp.ne.s32.totalorder %s70, %s86
      %p88 = scmp.eq.s32.totalorder %s20, 0
      %p89 = por %p87, %p88
      %s91 = sadd.s32 %s90, 1
      %p94 = scmp.eq.s32.totalorder %s14, 1
      %p95 = scmp.ne.s32.totalorder %s90, %s92
      %p96 = scmp.eq.s32.totalorder %s14, 0
      %p97 = por %p95, %p96
      %p98 = scmp.ne.s32.totalorder %s90, %s92
      %p99 = scmp.eq.s32.totalorder %s19, 1
      %p100 = por %p98, %p99
      %p101 = scmp.ne.s32.totalorder %s92, %s93
      %p102 = scmp.eq.s32.totalorder %s19, 0
      %p103 = por %p101, %p102
      %p104 = scmp.ne.s32.totalorder %s92, %s93
      %p105 = scmp.eq.s32.totalorder %s20, 1
      %p106 = por %p104, %p105
      %p108 = scmp.ne.s32.totalorder %s93, %s107
      %p109 = scmp.eq.s32.totalorder %s20, 0
      %p110 = por %p108, %p109
      %s111 = ssub.s32 %s21, %s33
      %p112 = scmp.eq.s32.totalorder %s111, 0
      %s114 = sadd.s32 %s113, 1
      %s115 = scalar_select %p112, %s113, %s114
      %p118 = pneg %p112
      %p119 = scmp.eq.s32.totalorder %s14, 1
      %p120 = por %p118, %p119
      %p121 = scmp.ne.s32.totalorder %s113, %s116
      %p122 = scmp.eq.s32.totalorder %s14, 0
      %p123 = por %p121, %p122
      %p124 = scmp.ne.s32.totalorder %s113, %s116
      %p125 = scmp.eq.s32.totalorder %s19, 1
      %p126 = por %p124, %p125
      %p127 = scmp.ne.s32.totalorder %s116, %s117
      %p128 = scmp.eq.s32.totalorder %s19, 0
      %p129 = por %p127, %p128
      %p130 = scmp.ne.s32.totalorder %s116, %s117
      %p131 = scmp.eq.s32.totalorder %s20, 1
      %p132 = por %p130, %p131
      %p134 = scmp.ne.s32.totalorder %s117, %s133
      %p135 = scmp.eq.s32.totalorder %s20, 0
      %p136 = por %p134, %p135
      %s137 = ssub.s32 %s21, %s33
      %p138 = scmp.eq.s32.totalorder %s137, 0
      %s140 = sadd.s32 %s139, 1
      %s141 = scalar_select %p138, %s139, %s140
      %p144 = pneg %p138
      %p145 = scmp.eq.s32.totalorder %s14, 1
      %p146 = por %p144, %p145
      %p147 = scmp.ne.s32.totalorder %s139, %s142
      %p148 = scmp.eq.s32.totalorder %s14, 0
      %p149 = por %p147, %p148
      %p150 = scmp.ne.s32.totalorder %s139, %s142
      %p151 = scmp.eq.s32.totalorder %s19, 1
      %p152 = por %p150, %p151
      %p153 = scmp.ne.s32.totalorder %s142, %s143
      %p154 = scmp.eq.s32.totalorder %s19, 0
      %p155 = por %p153, %p154
      %p156 = scmp.ne.s32.totalorder %s142, %s143
      %p157 = scmp.eq.s32.totalorder %s20, 1
      %p158 = por %p156, %p157
      %p160 = scmp.ne.s32.totalorder %s143, %s159
      %p161 = scmp.eq.s32.totalorder %s20, 0
      %p162 = por %p160, %p161
      %p163 = scmp.le.s32.totalorder 1, %s14
      %p164 = scmp.lt.s32.totalorder %s14, 3
      %p165 = pnand %p163, %p164
      %p166 = pneg %p165
      // Predicated region
      $region9: #{tpu_custom_call.1} parent=5 // pred_check
        _
      $region10: #{tpu_custom_call.1} parent=5 // pred_check_branch
        %168 = sbr.rel (%p165) target = $region12
      $region11: #{tpu_custom_call.1} parent=5 // pred_region
        %s169 = ssub.s32 %s14, 1
        // Predicated region
        $region13: #{tpu_custom_call.1} parent=11 // pred_check
          %p170 = pneg %p103
        $region14: #{tpu_custom_call.1} parent=11 // pred_check_branch
          %172 = sbr.rel (%p170) target = $region16
        $region15: #{tpu_custom_call.1} parent=11 // pred_region
          _
        $region16: #{tpu_custom_call.1} parent=11 // pred_fallthru
          _
      $region12: #{tpu_custom_call.1} parent=5 // pred_fallthru
        _
      %p173 = scmp.lt.s32.totalorder %s14, 2
      // Predicated region
      $region17: #{tpu_custom_call.1} parent=5 // pred_check
        %p174 = pneg %p173
      $region18: #{tpu_custom_call.1} parent=5 // pred_check_branch
        %176 = sbr.rel (%p174) target = $region20
      $region19: #{tpu_custom_call.1} parent=5 // pred_region
        // Predicated region
        $region21: #{tpu_custom_call.1} parent=19 // pred_check
          %p177 = pneg %p48
        $region22: #{tpu_custom_call.1} parent=19 // pred_check_branch
          %179 = sbr.rel (%p177) target = $region24
        $region23: #{tpu_custom_call.1} parent=19 // pred_region
          %s180 = sand.u32 %s38, 1
          %s181 = scalar_lea.sflag [#allocation5], %s180
          %s182 = sand.u32 %s38, 1
          %s183 = smul.addr %s182, 8
          %s184 = scalar_lea.vmem [#allocation4], %s183
          %s185 = smul.u32 2, %s22
          %s187 = ssub.s32 128, 128
          %188 = vsyncadd %s181, %s187
          %s189 = smul.addr %s21, 2
          %s190 = sadd.s32 %s185, %s189
          %s191 = smul.addr %s190, 64
          %s192 = scalar_lea.hbm %s0, %s191
          %s194 = sshll.u32 %s184, 4
          %s195 = int_to_ptr.vmem [resolvable:$true] %s194
          %197 = dma.hbm_to_vmem [thread:$0]  %s192, 128, %s195, %s181
        $region24: #{tpu_custom_call.1} parent=19 // pred_fallthru
          _
        // Predicated region
        $region25: #{tpu_custom_call.1} parent=19 // pred_check
          %p198 = pneg %p76
        $region26: #{tpu_custom_call.1} parent=19 // pred_check_branch
          %200 = sbr.rel (%p198) target = $region28
        $region27: #{tpu_custom_call.1} parent=19 // pred_region
          %s201 = smul.u32 2, %s22
          %p202 = scmp.lt.s32.totalorder %s21, 1
          %s203 = scalar_select %p202, %s21, 1
          %p204 = scmp.lt.s32.totalorder %s201, 1
          %s205 = scalar_select %p204, %s201, 1
          %s206 = smul.addr %s203, 2
          %s207 = sadd.s32 %s205, %s206
          %s208 = scalar_lea.vmem %s1, %s207
          %s209 = smul.u32 2, %s22
        $region28: #{tpu_custom_call.1} parent=19 // pred_fallthru
          _
      $region20: #{tpu_custom_call.1} parent=5 // pred_fallthru
        _
      %p210 = scmp.le.s32.totalorder 1, %s14
      %p211 = scmp.lt.s32.totalorder %s14, 3
      %p212 = pnand %p210, %p211
      %p213 = pneg %p212
      // Predicated region
      $region29: #{tpu_custom_call.1} parent=5 // pred_check
        _
      $region30: #{tpu_custom_call.1} parent=5 // pred_check_branch
        %215 = sbr.rel (%p212) target = $region32
      $region31: #{tpu_custom_call.1} parent=5 // pred_region
        %s216 = ssub.s32 %s14, 1
        %s217 = sand.u32 %s41, 1
        %s218 = scalar_lea.sflag [#allocation5], %s217
        %s219 = sand.u32 %s41, 1
        %s220 = smul.addr %s219, 8
        %s221 = scalar_lea.vmem [#allocation4], %s220
        // Predicated region
        $region33: #{tpu_custom_call.1} parent=31 // pred_check
          %p222 = pneg %p54
        $region34: #{tpu_custom_call.1} parent=31 // pred_check_branch
          %224 = sbr.rel (%p222) target = $region36
        $region35: #{tpu_custom_call.1} parent=31 // pred_region
          %225 = dma.done %s218, 128
        $region36: #{tpu_custom_call.1} parent=31 // pred_fallthru
          _
        %s226 = sand.u32 %s41, 1
        %s227 = scalar_lea.sflag [#allocation5], %s226
        %s228 = sand.u32 %s41, 1
        %s229 = smul.addr %s228, 8
        %s230 = scalar_lea.vmem [#allocation4], %s229
        %p231 = pneg %p54
        %p232 = pneg %p51
        %s233 = smul.u32 2, %s24
        %p234 = scmp.lt.s32.totalorder %s23, 1
        %s235 = scalar_select %p234, %s23, 1
        %p236 = scmp.lt.s32.totalorder %s233, 1
        %s237 = scalar_select %p236, %s233, 1
        %s238 = smul.addr %s235, 2
        %s239 = sadd.s32 %s237, %s238
        %s240 = scalar_lea.vmem %s1, %s239
        %p241 = pneg %p82
        %p242 = pneg %p79
        %p243 = pneg %p103
        %p244 = pneg %p100
        %p245 = pneg %p129
        %p246 = pneg %p126
        %p247 = scmp.lt.s32.totalorder %s23, 1
        %s248 = scalar_select %p247, %s23, 1
        %s249 = scalar_lea.vmem %s3, %s248
        %p250 = pneg %p155
        %p251 = pneg %p152
        %p252 = scmp.lt.s32.totalorder %s23, 1
        %s253 = scalar_select %p252, %s23, 1
        %s254 = scalar_lea.vmem %s4, %s253
        %s255 = smul.u32 2, %s24
        %s256 = smul.u32 2, %s24
        %p257 = scmp.lt.s32.totalorder %s23, 1
        %s258 = scalar_select %p257, %s23, 1
        %p259 = scmp.lt.s32.totalorder %s256, 1
        %s260 = scalar_select %p259, %s256, 1
        %s261 = smul.addr %s258, 2
        %s262 = sadd.s32 %s260, %s261
        %s263 = scalar_lea.vmem %s1, %s262
        %s264 = smul.u32 2, %s24
        %p265 = scmp.lt.s32.totalorder %s23, 1
        %s266 = scalar_select %p265, %s23, 1
        %s267 = scalar_lea.vmem %s3, %s266
        %p268 = scmp.lt.s32.totalorder %s23, 1
        %s269 = scalar_select %p268, %s23, 1
        %s270 = scalar_lea.vmem %s4, %s269
        %p271 = scmp.eq.s32.totalorder %s24, 0
        // Predicated region
        $region37: #{tpu_custom_call.1} parent=31 // pred_check
          %p272 = pneg %p271
        $region38: #{tpu_custom_call.1} parent=31 // pred_check_branch
          %274 = sbr.rel (%p272) target = $region40
        $region39: #{tpu_custom_call.1} parent=31 // pred_region
          %v275 = vlaneseq
          %vm276 = vcmp.ge.s32.totalorder %v275, 0
          %vm277 = vcmp.lt.s32.totalorder %v275, 256
          %vm278 = vmand %vm276, %vm277
          %279 = vst.msk [vmem:[#allocation2] sm:$0x3] %vm278, 0.0
          %280 = vst.msk [vmem:[#allocation3] sm:$0x3] %vm278, 0.0
        $region40: #{tpu_custom_call.1} parent=31 // pred_fallthru
          _
        %v281 = vld [vmem:[%s221] sm:$0xff]
        %v282 = vld [vmem:[%s263] sm:$0x3]
        %v284 = vcombine.high %v281, %v281
        %vm286 = vcmask 1043456
        %v287 = vsel %vm286, %v281, -inf
        %v288 = vrot.slane %v287, 4
        %v289 = vmax.f32 %v287, %v288
        %v290 = vrot.slane %v289, 2
        %v291 = vmax.f32 %v289, %v290
        %v292 = vrot.slane %v291, 1
        %v293 = vmax.f32 %v291, %v292
        %v294 = vsel %vm286, %v284, -inf
        %v295 = vrot.slane %v294, 4
        %v296 = vmax.f32 %v294, %v295
        %v297 = vrot.slane %v296, 2
        %v298 = vmax.f32 %v296, %v297
        %v299 = vrot.slane %v298, 1
        %v300 = vmax.f32 %v298, %v299
        %v303 = vcombine.low %v293, %v300
        %v305 = vsub.f32 %v281, %v303
        %v306 = vmul.f32 %v305, 1.442695
        %v307 = vpow.pop %v306
        %v309 = vcombine.high %v307, %v307
        %v311 = vsel %vm286, %v307, 0.0
        %v312 = vrot.slane %v311, 4
        %v313 = vadd.f32 %v311, %v312
        %v314 = vrot.slane %v313, 2
        %v315 = vadd.f32 %v313, %v314
        %v316 = vrot.slane %v315, 1
        %v317 = vadd.f32 %v315, %v316
        %v318 = vsel %vm286, %v309, 0.0
        %v319 = vrot.slane %v318, 4
        %v320 = vadd.f32 %v318, %v319
        %v321 = vrot.slane %v320, 2
        %v322 = vadd.f32 %v320, %v321
        %v323 = vrot.slane %v322, 1
        %v324 = vadd.f32 %v322, %v323
        %v325 = vlog2.pop %v317
        %v326 = vmul.f32 %v325, 0.6931472
        %v327 = vlog2.pop %v324
        %v328 = vmul.f32 %v327, 0.6931472
        %v329 = vlaneseq
        %v330 = vshrl.u32 %v329, 7
        %v331 = vlaneseq
        %v332 = vshrl.u32 %v331, 7
        %v333 = vsub.s32 0, %v332
        %v334 = vrot.slane %v282, %v333
        %v335 = vlaneseq
        %v336 = vshrl.u32 %v335, 7
        %v337 = vsub.s32 1, %v336
        %v338 = vrot.slane %v282, %v337
        %vm339 = vcmp.eq.s32.totalorder %v330, %v334
        %vm340 = vcmp.eq.s32.totalorder %v330, %v338
        %v342 = vcombine.high %v305, %v305
        %v344 = vsel %vm339, %v305, 0.0
        %v345 = vsel %vm340, %v342, 0.0
        %v346 = vsel %vm286, %v344, 0.0
        %v347 = vrot.slane %v346, 4
        %v348 = vadd.f32 %v346, %v347
        %v349 = vrot.slane %v348, 2
        %v350 = vadd.f32 %v348, %v349
        %v351 = vrot.slane %v350, 1
        %v352 = vadd.f32 %v350, %v351
        %v353 = vsel %vm286, %v345, 0.0
        %v354 = vrot.slane %v353, 4
        %v355 = vadd.f32 %v353, %v354
        %v356 = vrot.slane %v355, 2
        %v357 = vadd.f32 %v355, %v356
        %v358 = vrot.slane %v357, 1
        %v359 = vadd.f32 %v357, %v358
        %v360 = vsub.f32 %v326, %v352
        %v361 = vsub.f32 %v328, %v359
        %vm362 = vcmp.ge.s32.totalorder %v282, 0
        %vm363 = vcmp.ne.s32.totalorder %v282, 255
        %vm364 = vmand %vm362, %vm363
        %v365 = vlaneseq
        %v366 = vand.u32 %v365, 127
        %v367 = vadd.s32 %v366, 128
        %s368 = smul.u32 %s24, 256
        %v369 = vstv %s368
        %v370 = vadd.s32 %v369, %v366
        %v371 = vadd.s32 %v369, %v367
        %vm372 = vcmp.lt.s32.totalorder %v370, 256
        %vm373 = vcmp.lt.s32.totalorder %v371, 256
        %v374 = vsel %vm372, 1, 0
        %v375 = vsel %vm373, 1, 0
        %v376 = vcombine.low %v374, %v375
        %v378 = vunpack.c.l.s4 1966171168
        %v379 = vunpack.c.0.s8 %v378
        %v380 = vlaneseq
        %v381 = vshrl.u32 %v380, 7
        %v382 = vsub.s32 %v379, %v381
        %v383 = vrot.slane %v376, %v382
        %v385 = vunpack.c.l.s4 1966171168
        %v386 = vunpack.c.0.s8 %v385
        %v387 = vlaneseq
        %v388 = vshrl.u32 %v387, 7
        %v389 = vsub.s32 %v386, %v388
        %v390 = vrot.slane %v383, %v389
        %vm391 = vcmp.ne.s32.totalorder %v390, 0
        %vm392 = vmand %vm364, %vm391
        %v393 = vld [vmem:[#allocation2] sm:$0x3]
        %v396 = vcombine.low %v360, %v361
        %v398 = vunpack.c.l.s4 1966171168
        %v399 = vunpack.c.0.s8 %v398
        %v400 = vlaneseq
        %v401 = vshrl.u32 %v400, 7
        %v402 = vsub.s32 %v399, %v401
        %v403 = vrot.slane %v396, %v402
        %v405 = vunpack.c.l.s4 1966171168
        %v406 = vunpack.c.0.s8 %v405
        %v407 = vlaneseq
        %v408 = vshrl.u32 %v407, 7
        %v409 = vsub.s32 %v406, %v408
        %v410 = vrot.slane %v403, %v409
        %v412 = vsel %vm392, %v410, 0.0
        %v413 = vadd.f32 %v393, %v412
        %v414 = vlaneseq
        %vm415 = vcmp.ge.s32.totalorder %v414, 0
        %vm416 = vcmp.lt.s32.totalorder %v414, 256
        %vm417 = vmand %vm415, %vm416
        %418 = vst.msk [vmem:[#allocation2] sm:$0x3] %vm417, %v413
        %v419 = vld [vmem:[#allocation3] sm:$0x3]
        %v420 = vsel %vm392, 1, 0
        %v421 = vcvt.s32.f32 %v420
        %v422 = vadd.f32 %v419, %v421
        %423 = vst.msk [vmem:[#allocation3] sm:$0x3] %vm417, %v422
        // Predicated region
        $region41: #{tpu_custom_call.1} parent=31 // pred_check
          %p424 = pneg %p271
        $region42: #{tpu_custom_call.1} parent=31 // pred_check_branch
          %426 = sbr.rel (%p424) target = $region44
        $region43: #{tpu_custom_call.1} parent=31 // pred_region
          %v427 = vld [vmem:[#allocation2] sm:$0x3]
          %v429 = vlaneseq
          %v430 = vshrl.u32 %v429, 7
          %v431 = vsub.s32 0, %v430
          %v432 = vrot.slane %v427, %v431
          %v433 = vlaneseq
          %v434 = vshrl.u32 %v433, 7
          %v435 = vsub.s32 1, %v434
          %v436 = vrot.slane %v427, %v435
          %vm439 = vcmask 1040384
          %v440 = vsel %vm439, %v432, 0.0
          %v441 = vsel %vm439, %v436, 0.0
          %v442 = vadd.f32 %v440, %v441
          %443 = vadd.xlane.f32.xlu0 %v442
          %v444 = vpop.xlane.xlu0 %443
          %v445 = vrot.slane %v444, 4
          %v446 = vadd.f32 %v444, %v445
          %v447 = vrot.slane %v446, 2
          %v448 = vadd.f32 %v446, %v447
          %v449 = vrot.slane %v448, 1
          %v450 = vadd.f32 %v448, %v449
          %s451 = vtos %v450
          %v452 = vstv %s451
          %vm453 = vcmask 0
          %454 = vst.msk [vmem:[%s267] sm:$0x1] %vm453, %v452
          %v455 = vld [vmem:[#allocation3] sm:$0x3]
          %v457 = vlaneseq
          %v458 = vshrl.u32 %v457, 7
          %v459 = vsub.s32 0, %v458
          %v460 = vrot.slane %v455, %v459
          %v461 = vlaneseq
          %v462 = vshrl.u32 %v461, 7
          %v463 = vsub.s32 1, %v462
          %v464 = vrot.slane %v455, %v463
          %v467 = vsel %vm439, %v460, 0.0
          %v468 = vsel %vm439, %v464, 0.0
          %v469 = vadd.f32 %v467, %v468
          %470 = vadd.xlane.f32.xlu0 %v469
          %v471 = vpop.xlane.xlu0 %470
          %v472 = vrot.slane %v471, 4
          %v473 = vadd.f32 %v471, %v472
          %v474 = vrot.slane %v473, 2
          %v475 = vadd.f32 %v473, %v474
          %v476 = vrot.slane %v475, 1
          %v477 = vadd.f32 %v475, %v476
          %s478 = vtos %v477
          %v479 = vstv %s478
          %480 = vst.msk [vmem:[%s270] sm:$0x1] %vm453, %v479
        $region44: #{tpu_custom_call.1} parent=31 // pred_fallthru
          _
        %p481 = scmp.lt.s32.totalorder %s23, 1
        %s482 = scalar_select %p481, %s23, 1
        %s483 = scalar_lea.vmem %s3, %s482
        %p484 = scmp.lt.s32.totalorder %s23, 1
        %s485 = scalar_select %p484, %s23, 1
        %s486 = scalar_lea.vmem %s4, %s485
        // Predicated region
        $region45: #{tpu_custom_call.1} parent=31 // pred_check
          %p487 = pneg %p126
        $region46: #{tpu_custom_call.1} parent=31 // pred_check_branch
          %489 = sbr.rel (%p487) target = $region48
        $region47: #{tpu_custom_call.1} parent=31 // pred_region
          _
        $region48: #{tpu_custom_call.1} parent=31 // pred_fallthru
          _
        // Predicated region
        $region49: #{tpu_custom_call.1} parent=31 // pred_check
          %p490 = pneg %p152
        $region50: #{tpu_custom_call.1} parent=31 // pred_check_branch
          %492 = sbr.rel (%p490) target = $region52
        $region51: #{tpu_custom_call.1} parent=31 // pred_region
          _
        $region52: #{tpu_custom_call.1} parent=31 // pred_fallthru
          _
      $region32: #{tpu_custom_call.1} parent=5 // pred_fallthru
        _
      %p493 = scmp.le.s32.totalorder 2, %s14
      // Predicated region
      $region53: #{tpu_custom_call.1} parent=5 // pred_check
        %p494 = pneg %p493
      $region54: #{tpu_custom_call.1} parent=5 // pred_check_branch
        %496 = sbr.rel (%p494) target = $region56
      $region55: #{tpu_custom_call.1} parent=5 // pred_region
        %s497 = ssub.s32 %s14, 2
        // Predicated region
        $region57: #{tpu_custom_call.1} parent=55 // pred_check
          %p498 = pneg %p132
        $region58: #{tpu_custom_call.1} parent=55 // pred_check_branch
          %500 = sbr.rel (%p498) target = $region60
        $region59: #{tpu_custom_call.1} parent=55 // pred_region
          %p501 = scmp.lt.s32.totalorder %s25, 1
          %s502 = scalar_select %p501, %s25, 1
          %s503 = scalar_lea.vmem %s3, %s502
        $region60: #{tpu_custom_call.1} parent=55 // pred_fallthru
          _
        // Predicated region
        $region61: #{tpu_custom_call.1} parent=55 // pred_check
          %p504 = pneg %p158
        $region62: #{tpu_custom_call.1} parent=55 // pred_check_branch
          %506 = sbr.rel (%p504) target = $region64
        $region63: #{tpu_custom_call.1} parent=55 // pred_region
          %p507 = scmp.lt.s32.totalorder %s25, 1
          %s508 = scalar_select %p507, %s25, 1
          %s509 = scalar_lea.vmem %s4, %s508
        $region64: #{tpu_custom_call.1} parent=55 // pred_fallthru
          _
      $region56: #{tpu_custom_call.1} parent=5 // pred_fallthru
        _
    $region6: #{tpu_custom_call.1} parent=1 // loop_footer
      %s18 = sadd.s32 1, %s14
    $region7: #{tpu_custom_call.1} parent=1 // loop_footer_branch
      %13 = sbr.rel target = $region3
    $region8: #{tpu_custom_call.1} parent=1 // loop_exit
      _
    %510 = vsyncpa [#allocation5], 1
    %s511 = scalar_lea.sflag [#allocation5], 1
    %512 = vsyncpa %s511, 1

</llo_original>
